<compile_context>
chip_gen: v5e
topology: v5e:2x2
jax: 0.10.0
libtpu: 0.0.40
codegen_flags: <defaults>
</compile_context>

<pallas_src>
import functools

import jax
import jax.numpy as jnp
from jax import lax
from jax.experimental import pallas as pl
from jax.experimental.pallas import tpu as pltpu


def _round_up(v, mult):
    return ((v + mult - 1) // mult) * mult


def _tcr_partial_gram_kernel(x_ref, o_ref, *, tm, m, kpp, ragged):
    """Accumulate this part's partial Gram sum (sum over its m-tiles of x^T x)."""
    k = pl.program_id(1)  # m-tile index within this part (reduction axis)

    @pl.when(k == 0)
    def _init():
        o_ref[...] = jnp.zeros_like(o_ref)

    x = x_ref[...]  # (tm, p_pad), native dtype

    if ragged:
        # Zero rows past the logical end of X (ragged last tile and/or the
        # phantom tile of an uneven part split).  A select (not multiply) so
        # any garbage in the out-of-bounds region — even NaN/Inf — is dropped.
        c = pl.program_id(0)
        t = c * kpp + k
        rows = t * tm + lax.broadcasted_iota(jnp.int32, x.shape, 0)
        x = jnp.where(rows < m, x, jnp.zeros_like(x))

    # Contract directly over the sample axis: (tm,p) x (tm,p) -> (p,p) on the
    # MXU with f32 accumulation; no materialized transpose of the big tile.
    o_ref[...] += lax.dot_general(
        x, x,
        dimension_numbers=(((0,), (0,)), ((), ())),
        preferred_element_type=jnp.float32,
    )


def total_coding_rate(x, eps=0.01, _max_tm=None):
    """JAX/Pallas equivalent of TotalCodingRate().forward(x) for 2-D x (m, p)."""
    m, p = x.shape
    scalar = float(p) / (float(m) * float(eps))  # uses the ORIGINAL p, m

    # Lane-dense feature axis: pad p up to a multiple of 128 with zero columns.
    p_pad = _round_up(max(p, 1), 128)
    if p_pad != p:
        x = jnp.pad(x, ((0, 0), (0, p_pad - p)))
    # NOTE: the m axis is intentionally NOT padded (masked in-kernel instead).

    itemsize = jnp.dtype(x.dtype).itemsize
    rq = max(8, 32 // itemsize)  # sublane packing: 8 f32 / 16 bf16 / 32 int8

    # Per-chip VMEM budget (~75% of physical; the rest stays with the compiler).
    try:
        vmem_cap = int(pltpu.get_tpu_info().vmem_capacity_bytes)
    except Exception:
        vmem_cap = 64 << 20  # conservative fallback (v7x-sized)
    budget = (vmem_cap * 3) // 4

    out_bytes = 2 * p_pad * p_pad * 4        # resident f32 output block (+ slack)
    headroom = 4 << 20
    in_budget = max(budget - out_bytes - headroom, 2 * rq * p_pad * itemsize)
    tm = in_budget // (2 * p_pad * itemsize)  # double-buffered input tiles
    tm = int(min(tm, 16384, _round_up(m, rq)))
    if _max_tm is not None:
        tm = int(min(tm, _max_tm))
    tm = max(rq, (tm // rq) * rq)

    num_k = pl.cdiv(m, tm)
    num_parts = 2 if num_k >= 2 else 1   # feeds both v7x TCs; harmless on 1-TC chips
    kpp = pl.cdiv(num_k, num_parts)
    ragged = (m % tm != 0) or (num_parts * kpp != num_k)

    if num_parts * kpp != num_k:
        # Uneven split: clamp the block index so the phantom tile's DMA stays in
        # bounds; its contribution is fully zeroed by the in-kernel row mask.
        def x_index_map(c, k):
            return (jnp.minimum(c * kpp + k, num_k - 1), 0)
    else:
        def x_index_map(c, k):
            return (c * kpp + k, 0)

    needed = 2 * tm * p_pad * itemsize + out_bytes + headroom
    vmem_limit = int(min(max(needed, 32 << 20), budget))

    partials = pl.pallas_call(
        functools.partial(_tcr_partial_gram_kernel,
                          tm=tm, m=m, kpp=kpp, ragged=ragged),
        out_shape=jax.ShapeDtypeStruct((num_parts, p_pad, p_pad), jnp.float32),
        grid_spec=pltpu.PrefetchScalarGridSpec(
            num_scalar_prefetch=0,
            grid=(num_parts, kpp),
            in_specs=[pl.BlockSpec((tm, p_pad), x_index_map)],
            out_specs=pl.BlockSpec((None, p_pad, p_pad), lambda c, k: (c, 0, 0)),
        ),
        compiler_params=pltpu.CompilerParams(
            dimension_semantics=("parallel", "arbitrary"),
            vmem_limit_bytes=vmem_limit,
        ),
    )(x)

    # Tiny XLA epilogue: combine per-core partials, apply the scalar and add the
    # identity (keeps the (p_pad, p_pad) iota/eye temporaries out of the kernel).
    gram = partials[0] if num_parts == 1 else jnp.sum(partials, axis=0)
    a = jnp.float32(scalar) * gram + jnp.eye(p_pad, dtype=jnp.float32)

    # A = scalar * X^T X + I is SPD by construction -> Cholesky-based logdet on
    # the full padded matrix (padded block is exactly identity, contributing
    # log(1) = 0), so no unaligned [:p, :p] slice is needed.
    # TODO(synk): Cholesky/logdet has no clean Pallas TPU primitive; the small
    # (p_pad, p_pad) factorization stays in XLA.
    chol = jnp.linalg.cholesky(a)
    return jnp.sum(jnp.log(jnp.diag(chol)))


def _reference(x, eps=0.01):
    m, p = x.shape
    w = x.T
    ref_a = (p / (m * eps)) * (w @ w.T) + jnp.eye(p, dtype=jnp.float32)
    _, ref_logdet = jnp.linalg.slogdet(ref_a)
    return ref_logdet / 2.0


if __name__ == "__main__":
    key = jax.random.PRNGKey(0)

    # Main example: m samples of p-dim features.
    m, p = 64, 32
    x = jax.random.normal(key, (m, p), dtype=jnp.float32)
    loss = jax.block_until_ready(total_coding_rate(x, eps=0.01))
    ref = _reference(x, eps=0.01)
    assert jnp.allclose(loss, ref, rtol=1e-4, atol=1e-4), (loss, ref)

    # Exercise the ragged-tile mask + 2-part (megacore) split.
    k2 = jax.random.PRNGKey(1)
    x2 = jax.random.normal(k2, (100, 40), dtype=jnp.float32)
    loss2 = jax.block_until_ready(total_coding_rate(x2, eps=0.01, _max_tm=32))
    ref2 = _reference(x2, eps=0.01)
    assert jnp.allclose(loss2, ref2, rtol=1e-4, atol=1e-4), (loss2, ref2)

    # Exercise the uneven part split (clamped phantom tile, fully masked).
    loss3 = jax.block_until_ready(total_coding_rate(x2, eps=0.01, _max_tm=40))
    assert jnp.allclose(loss3, ref2, rtol=1e-4, atol=1e-4), (loss3, ref2)

    print("KERNEL_OK")
</pallas_src>

<mosaic_0001>
module attributes {stable_mosaic.version = 11 : i64} {
  func.func @_tcr_partial_gram_kernel(%arg0: i32, %arg1: i32, %arg2: memref<64x128xf32, #tpu.memory_space<vmem>>, %arg3: memref<1x128x128xf32, #tpu.memory_space<vmem>>) attributes {dimension_semantics = [#tpu.dimension_semantics<parallel>, #tpu.dimension_semantics<arbitrary>], iteration_bounds = array<i64: 1, 1>, scalar_prefetch = 0 : i64, scratch_operands = 0 : i64, tpu.core_type = #tpu.core_type<tc>, window_params = [{transform_indices = @transform_0, window_bounds = array<i64: 64, 128>}, {transform_indices = @transform_1, window_bounds = array<i64: 1, 128, 128>}]} {
    %c0_i32 = arith.constant 0 : i32
    %0 = arith.cmpi eq, %arg1, %c0_i32 : i32
    %1 = arith.extui %0 : i1 to i32
    %c0_i32_0 = arith.constant 0 : i32
    %2 = arith.cmpi ne, %1, %c0_i32_0 : i32
    scf.if %2 {
      %cst_8 = arith.constant 0.000000e+00 : f32
      %11 = vector.broadcast %cst_8 : f32 to vector<128x128xf32>
      %c0_9 = arith.constant 0 : index
      %c0_10 = arith.constant 0 : index
      %c0_11 = arith.constant 0 : index
      %12 = vector.load %arg3[%c0_9, %c0_10, %c0_11] : memref<1x128x128xf32, #tpu.memory_space<vmem>>, vector<1x128x128xf32>
      %13 = vector.shape_cast %12 : vector<1x128x128xf32> to vector<128x128xf32>
      %14 = vector.shape_cast %11 : vector<128x128xf32> to vector<1x128x128xf32>
      tpu.vector_store %arg3[%c0_9, %c0_10, %c0_11], %14 {strides = array<i32>} : memref<1x128x128xf32, #tpu.memory_space<vmem>>, vector<1x128x128xf32>,
    } else {
    }
    %c0 = arith.constant 0 : index
    %c0_1 = arith.constant 0 : index
    %3 = vector.load %arg2[%c0, %c0_1] : memref<64x128xf32, #tpu.memory_space<vmem>>, vector<64x128xf32>
    %c0_2 = arith.constant 0 : index
    %c0_3 = arith.constant 0 : index
    %c0_4 = arith.constant 0 : index
    %4 = vector.load %arg3[%c0_2, %c0_3, %c0_4] : memref<1x128x128xf32, #tpu.memory_space<vmem>>, vector<1x128x128xf32>
    %5 = vector.shape_cast %4 : vector<1x128x128xf32> to vector<128x128xf32>
    %cst = arith.constant dense<0.000000e+00> : vector<128x128xf32>
    %6 = tpu.matmul %3, %3, %cst {dimension_numbers = #tpu.dot_dimension_numbers<[0], [0], [1], [1], [0, 1, 1, 1], [], []>} : vector<64x128xf32>, vector<64x128xf32>, vector<128x128xf32> -> vector<128x128xf32>
    %7 = arith.addf %5, %6 : vector<128x128xf32>
    %c0_5 = arith.constant 0 : index
    %c0_6 = arith.constant 0 : index
    %c0_7 = arith.constant 0 : index
    %8 = vector.load %arg3[%c0_5, %c0_6, %c0_7] : memref<1x128x128xf32, #tpu.memory_space<vmem>>, vector<1x128x128xf32>
    %9 = vector.shape_cast %8 : vector<1x128x128xf32> to vector<128x128xf32>
    %10 = vector.shape_cast %7 : vector<128x128xf32> to vector<1x128x128xf32>
    tpu.vector_store %arg3[%c0_5, %c0_6, %c0_7], %10 {strides = array<i32>} : memref<1x128x128xf32, #tpu.memory_space<vmem>>, vector<1x128x128xf32>,
    return
  }
  func.func @transform_0(%arg0: i32, %arg1: i32) -> (i32, i32) {
    %c1_i32 = arith.constant 1 : i32
    %0 = arith.muli %arg0, %c1_i32 : i32
    %1 = arith.addi %0, %arg1 : i32
    %c0_i32 = arith.constant 0 : i32
    %c0_i32_0 = arith.constant 0 : i32
    return %1, %c0_i32 : i32, i32
  }
  func.func @transform_1(%arg0: i32, %arg1: i32) -> (i32, i32, i32) {
    %c0_i32 = arith.constant 0 : i32
    %c0_i32_0 = arith.constant 0 : i32
    %c0_i32_1 = arith.constant 0 : i32
    return %arg0, %c0_i32, %c0_i32_0 : i32, i32, i32
  }
}

</mosaic_0001>

<llo_original>
// kernel: tpu_custom_call.1
$region0: #{tpu_custom_call.1}
  #allocation0 [shape = 'u32[]', space=smem, size = 0x4, offset = 0x4, fixed_abs, tag = 'smem constant byte address 0x4 - core index']
  #allocation1 [shape = 'u32[72,128]{1,0:T(1,128)}', space=vmem, size = 0x9000, scoped, tag = 'internal scratch']
  %s0 = inlined_call_operand.hbm [shape: f32[64,128], index: 0, kind: input, shape index: {}]
  %s1 = inlined_call_operand.hbm [shape: f32[1,128,128], index: 1, kind: output, shape index: {}]
  %s2 = sld [smem:[#allocation0]]
  $region22: #{tpu_custom_call.1} parent=0
    _
  %s4 = ssub.s32 1, %s2
  %s5 = scalar_select 0, %s4, %s2
  $region1: #{tpu_custom_call.1} parent=0
    #allocation2 [shape = 'u8[32768]{0}', space=vmem, size = 0x8000, scoped, tag = 'input window, operand 0, single buffered']
    #allocation3 [shape = 's32[1]{0}', space=sflag, size = 0x4, scoped, tag = 'scoped memory for tpu_custom_call.1']
    #allocation4 [shape = 's32[1]{0}', space=sflag, size = 0x4, scoped, tag = 'scoped memory for tpu_custom_call.1']
    #allocation5 [shape = 'u8[65536]{0}', space=vmem, size = 0x10000, scoped, tag = 'output window, operand 0, single buffered']
    %6 = vsyncpa [#allocation3], 0
    %7 = vsyncpa [#allocation4], 0
    // Predicated region
    $region2: #{tpu_custom_call.1} parent=1 // pred_check
      _
    $region3: #{tpu_custom_call.1} parent=1 // pred_check_branch
      %9 = sbr.rel (0) target = $region5
    $region4: #{tpu_custom_call.1} parent=1 // pred_region
      %s10 = sadd.s32 0, 0
      %s11 = smul.u32 8, %s10
      %13 = vsyncadd [#allocation3], 0
      %s14 = smul.addr %s11, 8
      %s15 = scalar_lea.hbm %s0, %s14
      %s16 = sshll.u32 %s15, 4
      %s17 = int_to_ptr.hbm [resolvable:$true] %s16
      %s18 = sshll.u32 [#allocation2], 4
      %s19 = int_to_ptr.vmem [resolvable:$true] %s18
      %24 = dma.hbm_to_vmem [thread:$0]  %s17, 1024, %s19, [#allocation3], 128, 128, 8
    $region5: #{tpu_custom_call.1} parent=1 // pred_fallthru
      _
    // Predicated region
    $region6: #{tpu_custom_call.1} parent=1 // pred_check
      _
    $region7: #{tpu_custom_call.1} parent=1 // pred_check_branch
      %26 = sbr.rel (0) target = $region9
    $region8: #{tpu_custom_call.1} parent=1 // pred_region
      %28 = dma.done [#allocation3], 1024
    $region9: #{tpu_custom_call.1} parent=1 // pred_fallthru
      _
    %s29 = sadd.s32 0, 0
    %s30 = smul.u32 8, %s29
    %p31 = scmp.eq.s32.totalorder 0, 0
    // Predicated region
    $region10: #{tpu_custom_call.1} parent=1 // pred_check
      %p32 = pneg %p31
    $region11: #{tpu_custom_call.1} parent=1 // pred_check_branch
      %34 = sbr.rel (%p32) target = $region13
    $region12: #{tpu_custom_call.1} parent=1 // pred_region
      %35 = vst [vmem:[#allocation5] sm:$0xff] 0.0
      %36 = vst [vmem:[#allocation5 + $0x8] sm:$0xff] 0.0
      %37 = vst [vmem:[#allocation5 + $0x10] sm:$0xff] 0.0
      %38 = vst [vmem:[#allocation5 + $0x18] sm:$0xff] 0.0
      %39 = vst [vmem:[#allocation5 + $0x20] sm:$0xff] 0.0
      %40 = vst [vmem:[#allocation5 + $0x28] sm:$0xff] 0.0
      %41 = vst [vmem:[#allocation5 + $0x30] sm:$0xff] 0.0
      %42 = vst [vmem:[#allocation5 + $0x38] sm:$0xff] 0.0
      %43 = vst [vmem:[#allocation5 + $0x40] sm:$0xff] 0.0
      %44 = vst [vmem:[#allocation5 + $0x48] sm:$0xff] 0.0
      %45 = vst [vmem:[#allocation5 + $0x50] sm:$0xff] 0.0
      %46 = vst [vmem:[#allocation5 + $0x58] sm:$0xff] 0.0
      %47 = vst [vmem:[#allocation5 + $0x60] sm:$0xff] 0.0
      %48 = vst [vmem:[#allocation5 + $0x68] sm:$0xff] 0.0
      %49 = vst [vmem:[#allocation5 + $0x70] sm:$0xff] 0.0
      %50 = vst [vmem:[#allocation5 + $0x78] sm:$0xff] 0.0
    $region13: #{tpu_custom_call.1} parent=1 // pred_fallthru
      _
    %v51 = vld [vmem:[#allocation2] sm:$0xff]
    %v52 = vld [vmem:[#allocation2 + $0x8] sm:$0xff]
    %v53 = vld [vmem:[#allocation2 + $0x10] sm:$0xff]
    %v54 = vld [vmem:[#allocation2 + $0x18] sm:$0xff]
    %v55 = vld [vmem:[#allocation2 + $0x20] sm:$0xff]
    %v56 = vld [vmem:[#allocation2 + $0x28] sm:$0xff]
    %v57 = vld [vmem:[#allocation2 + $0x30] sm:$0xff]
    %v58 = vld [vmem:[#allocation2 + $0x38] sm:$0xff]
    %v59 = vld [vmem:[#allocation5] sm:$0xff]
    %v60 = vld [vmem:[#allocation5 + $0x8] sm:$0xff]
    %v61 = vld [vmem:[#allocation5 + $0x10] sm:$0xff]
    %v62 = vld [vmem:[#allocation5 + $0x18] sm:$0xff]
    %v63 = vld [vmem:[#allocation5 + $0x20] sm:$0xff]
    %v64 = vld [vmem:[#allocation5 + $0x28] sm:$0xff]
    %v65 = vld [vmem:[#allocation5 + $0x30] sm:$0xff]
    %v66 = vld [vmem:[#allocation5 + $0x38] sm:$0xff]
    %v67 = vld [vmem:[#allocation5 + $0x40] sm:$0xff]
    %v68 = vld [vmem:[#allocation5 + $0x48] sm:$0xff]
    %v69 = vld [vmem:[#allocation5 + $0x50] sm:$0xff]
    %v70 = vld [vmem:[#allocation5 + $0x58] sm:$0xff]
    %v71 = vld [vmem:[#allocation5 + $0x60] sm:$0xff]
    %v72 = vld [vmem:[#allocation5 + $0x68] sm:$0xff]
    %v73 = vld [vmem:[#allocation5 + $0x70] sm:$0xff]
    %v74 = vld [vmem:[#allocation5 + $0x78] sm:$0xff]
    %75 = vxpose.xlu0.b32.start [1/16] %v51, 128
    %76 = vxpose.xlu0.b32.cont [2/16] %v52, 128
    %77 = vxpose.xlu0.b32.cont [3/16] %v53, 128
    %78 = vxpose.xlu0.b32.cont [4/16] %v54, 128
    %79 = vxpose.xlu0.b32.cont [5/16] %v55, 128
    %80 = vxpose.xlu0.b32.cont [6/16] %v56, 128
    %81 = vxpose.xlu0.b32.cont [7/16] %v57, 128
    %82 = vxpose.xlu0.b32.cont [8/16] %v58, 128
    %83 = vxpose.xlu0.b32.cont [9/16] 0.0, 128
    %84 = vxpose.xlu0.b32.cont [10/16] 0.0, 128
    %85 = vxpose.xlu0.b32.cont [11/16] 0.0, 128
    %86 = vxpose.xlu0.b32.cont [12/16] 0.0, 128
    %87 = vxpose.xlu0.b32.cont [13/16] 0.0, 128
    %88 = vxpose.xlu0.b32.cont [14/16] 0.0, 128
    %89 = vxpose.xlu0.b32.cont [15/16] 0.0, 128
    %90 = vxpose.xlu0.b32.end [16/16] 0.0, 128
    %v91 = vpop.trf.xlu0
    %v92 = vpop.trf.xlu0
    %v93 = vpop.trf.xlu0
    %v94 = vpop.trf.xlu0
    %v95 = vpop.trf.xlu0
    %v96 = vpop.trf.xlu0
    %v97 = vpop.trf.xlu0
    %v98 = vpop.trf.xlu0
    %v99 = vpop.trf.xlu0
    %v100 = vpop.trf.xlu0
    %v101 = vpop.trf.xlu0
    %v102 = vpop.trf.xlu0
    %v103 = vpop.trf.xlu0
    %v104 = vpop.trf.xlu0
    %v105 = vpop.trf.xlu0
    %v106 = vpop.trf.xlu0
    %vm107 = vcmask 523264
    %v109 = vsel %vm107, %v91, 0
    %v112 = vsel %vm107, %v92, 0
    %v115 = vsel %vm107, %v93, 0
    %v118 = vsel %vm107, %v94, 0
    %v121 = vsel %vm107, %v95, 0
    %v124 = vsel %vm107, %v96, 0
    %v127 = vsel %vm107, %v97, 0
    %v130 = vsel %vm107, %v98, 0
    %v133 = vsel %vm107, %v99, 0
    %v136 = vsel %vm107, %v100, 0
    %v139 = vsel %vm107, %v101, 0
    %v142 = vsel %vm107, %v102, 0
    %v145 = vsel %vm107, %v103, 0
    %v148 = vsel %vm107, %v104, 0
    %v151 = vsel %vm107, %v105, 0
    %v154 = vsel %vm107, %v106, 0
    %156 = vmatpush.msra.mxu0 0.0
    %157 = vmatpush.msra.mxu0 0.0
    %158 = vmatpush.msra.mxu0 0.0
    %159 = vmatpush.msra.mxu0 0.0
    %160 = vmatpush.msra.mxu0 0.0
    %161 = vmatpush.msra.mxu0 0.0
    %162 = vmatpush.msra.mxu0 0.0
    %163 = vmatpush.msra.mxu0 0.0
    %164 = vmatpush.msra.mxu0 %v58
    %165 = vmatpush.msra.mxu0 %v57
    %166 = vmatpush.msra.mxu0 %v56
    %167 = vmatpush.msra.mxu0 %v55
    %168 = vmatpush.msra.mxu0 %v54
    %169 = vmatpush.msra.mxu0 %v53
    %170 = vmatpush.msra.mxu0 %v52
    %171 = vmatpush.msra.mxu0 %v51
    %172 = vmatmul.f32.gmra.mxu0 %v109
    %v173 = vpop.f32.mrf.mxu0
    %v174 = vadd.f32 0.0, %v173
    %175 = vmatmul.f32.gmra.mxu0 %v112
    %v176 = vpop.f32.mrf.mxu0
    %v177 = vadd.f32 0.0, %v176
    %178 = vmatmul.f32.gmra.mxu0 %v115
    %v179 = vpop.f32.mrf.mxu0
    %v180 = vadd.f32 0.0, %v179
    %181 = vmatmul.f32.gmra.mxu0 %v118
    %v182 = vpop.f32.mrf.mxu0
    %v183 = vadd.f32 0.0, %v182
    %184 = vmatmul.f32.gmra.mxu0 %v121
    %v185 = vpop.f32.mrf.mxu0
    %v186 = vadd.f32 0.0, %v185
    %187 = vmatmul.f32.gmra.mxu0 %v124
    %v188 = vpop.f32.mrf.mxu0
    %v189 = vadd.f32 0.0, %v188
    %190 = vmatmul.f32.gmra.mxu0 %v127
    %v191 = vpop.f32.mrf.mxu0
    %v192 = vadd.f32 0.0, %v191
    %193 = vmatmul.f32.gmra.mxu0 %v130
    %v194 = vpop.f32.mrf.mxu0
    %v195 = vadd.f32 0.0, %v194
    %196 = vmatmul.f32.gmra.mxu0 %v133
    %v197 = vpop.f32.mrf.mxu0
    %v198 = vadd.f32 0.0, %v197
    %199 = vmatmul.f32.gmra.mxu0 %v136
    %v200 = vpop.f32.mrf.mxu0
    %v201 = vadd.f32 0.0, %v200
    %202 = vmatmul.f32.gmra.mxu0 %v139
    %v203 = vpop.f32.mrf.mxu0
    %v204 = vadd.f32 0.0, %v203
    %205 = vmatmul.f32.gmra.mxu0 %v142
    %v206 = vpop.f32.mrf.mxu0
    %v207 = vadd.f32 0.0, %v206
    %208 = vmatmul.f32.gmra.mxu0 %v145
    %v209 = vpop.f32.mrf.mxu0
    %v210 = vadd.f32 0.0, %v209
    %211 = vmatmul.f32.gmra.mxu0 %v148
    %v212 = vpop.f32.mrf.mxu0
    %v213 = vadd.f32 0.0, %v212
    %214 = vmatmul.f32.gmra.mxu0 %v151
    %v215 = vpop.f32.mrf.mxu0
    %v216 = vadd.f32 0.0, %v215
    %217 = vmatmul.f32.gmra.mxu0 %v154
    %v218 = vpop.f32.mrf.mxu0
    %v219 = vadd.f32 0.0, %v218
    %220 = vdwg.mxu0
    %v221 = vadd.f32 %v59, %v174
    %v222 = vadd.f32 %v60, %v177
    %v223 = vadd.f32 %v61, %v180
    %v224 = vadd.f32 %v62, %v183
    %v225 = vadd.f32 %v63, %v186
    %v226 = vadd.f32 %v64, %v189
    %v227 = vadd.f32 %v65, %v192
    %v228 = vadd.f32 %v66, %v195
    %v229 = vadd.f32 %v67, %v198
    %v230 = vadd.f32 %v68, %v201
    %v231 = vadd.f32 %v69, %v204
    %v232 = vadd.f32 %v70, %v207
    %v233 = vadd.f32 %v71, %v210
    %v234 = vadd.f32 %v72, %v213
    %v235 = vadd.f32 %v73, %v216
    %v236 = vadd.f32 %v74, %v219
    %237 = vst [vmem:[#allocation5] sm:$0xff] %v221
    %238 = vst [vmem:[#allocation5 + $0x8] sm:$0xff] %v222
    %239 = vst [vmem:[#allocation5 + $0x10] sm:$0xff] %v223
    %240 = vst [vmem:[#allocation5 + $0x18] sm:$0xff] %v224
    %241 = vst [vmem:[#allocation5 + $0x20] sm:$0xff] %v225
    %242 = vst [vmem:[#allocation5 + $0x28] sm:$0xff] %v226
    %243 = vst [vmem:[#allocation5 + $0x30] sm:$0xff] %v227
    %244 = vst [vmem:[#allocation5 + $0x38] sm:$0xff] %v228
    %245 = vst [vmem:[#allocation5 + $0x40] sm:$0xff] %v229
    %246 = vst [vmem:[#allocation5 + $0x48] sm:$0xff] %v230
    %247 = vst [vmem:[#allocation5 + $0x50] sm:$0xff] %v231
    %248 = vst [vmem:[#allocation5 + $0x58] sm:$0xff] %v232
    %249 = vst [vmem:[#allocation5 + $0x60] sm:$0xff] %v233
    %250 = vst [vmem:[#allocation5 + $0x68] sm:$0xff] %v234
    %251 = vst [vmem:[#allocation5 + $0x70] sm:$0xff] %v235
    %252 = vst [vmem:[#allocation5 + $0x78] sm:$0xff] %v236
    // Predicated region
    $region14: #{tpu_custom_call.1} parent=1 // pred_check
      _
    $region15: #{tpu_custom_call.1} parent=1 // pred_check_branch
      %254 = sbr.rel (0) target = $region17
    $region16: #{tpu_custom_call.1} parent=1 // pred_region
      %256 = vsyncadd [#allocation4], 0
      %s257 = sshll.u32 [#allocation5], 4
      %s258 = int_to_ptr.vmem [resolvable:$true] %s257
      %s259 = sshll.u32 %s1, 4
      %s260 = int_to_ptr.hbm [resolvable:$true] %s259
      %265 = dma.vmem_to_hbm [thread:$0]  %s258, 2048, %s260, [#allocation4], 128, 128, 8
    $region17: #{tpu_custom_call.1} parent=1 // pred_fallthru
      _
    // Predicated region
    $region18: #{tpu_custom_call.1} parent=1 // pred_check
      _
    $region19: #{tpu_custom_call.1} parent=1 // pred_check_branch
      %267 = sbr.rel (0) target = $region21
    $region20: #{tpu_custom_call.1} parent=1 // pred_region
      %269 = dma.done [#allocation4], 2048
    $region21: #{tpu_custom_call.1} parent=1 // pred_fallthru
      _
    %270 = vsyncpa [#allocation3], 1
    %271 = vsyncpa [#allocation4], 1

</llo_original>
